<compile_context>
chip_gen: v7x
topology: tpu7x:2x2x1
jax: 0.10.0
libtpu: 0.0.40
codegen_flags: <defaults>
</compile_context>

<pallas_src>
import jax
import jax.numpy as jnp
import numpy as np
from jax.experimental import pallas as pl
from jax.experimental.pallas import tpu as pltpu


def _round_up(a: int, b: int) -> int:
    return ((a + b - 1) // b) * b


def _vmem_capacity_bytes() -> int:
    """Physical per-core VMEM (generation-aware), with a conservative fallback."""
    try:
        cap = getattr(pltpu.get_tpu_info(), "vmem_capacity_bytes", None)
        if cap:
            return int(cap)
    except Exception:
        pass
    return 64 * 1024 * 1024  # v7x per-core VMEM: the smallest of v5e/v6e/v7x


def _select_tm(M, K, E, in_bytes, out_bytes, tile_budget, cap=2048, min_steps=8):
    """Pick the row tile.

    Preference order:
      1. one full-extent row block for small / awkward M (always legal),
      2. the largest 8-aligned tile that divides M, fits the VMEM tile budget
         and leaves >= min_steps grid steps (pipelining + megacore),
      3. the largest fitting 8-aligned tile, with row padding + post slice.
    """
    def tile_bytes(t):
        # double-buffered streamed patch tile + double-buffered output tile
        return 2 * t * (K * in_bytes + E * out_bytes)

    if M <= cap and tile_bytes(M) <= tile_budget and (M < 8 * min_steps or M % 8 != 0):
        return M, M

    upper = min(cap, M)
    if M >= 8 * min_steps:
        upper = min(upper, M // min_steps)
    upper = max(8, (upper // 8) * 8)

    t = upper
    while t >= 8:
        if M % t == 0 and tile_bytes(t) <= tile_budget:
            return t, M
        t -= 8

    t = upper
    while t > 8 and tile_bytes(t) > tile_budget:
        t -= 8
    return t, _round_up(M, t)


def _patch_embed_dw_kernel(patches_ref, w_ref, b_ref, out_ref):
    # Single lane-dense MXU matmul (depthwise weights folded into w_ref),
    # f32 accumulation, f32 bias epilogue.
    acc = jnp.dot(patches_ref[...], w_ref[...], preferred_element_type=jnp.float32)
    out_ref[...] = (acc + b_ref[...]).astype(out_ref.dtype)


def patch_embed_dw(x, dw_weights, pw_weight, pw_bias, patch_size, depth, *,
                   tm=None, compute_dtype=jnp.bfloat16, out_dtype=None):
    """PatchEmbed_DW forward.

    x: [B, C, H, W] (NCHW, matching the PyTorch module).
    dw_weights: `depth` arrays [C, 1, ps, ps] (depthwise conv weights, in
                application order; Conv2d(C, C, ks=ps, stride=ps, groups=C)).
    pw_weight: [E, C, 1, 1], pw_bias: [E].

    Returns [B, num_patches, E]  (== conv stack -> flatten(2).transpose(1, 2)).
    """
    B, C, H, W = x.shape
    ps = int(patch_size)
    depth = int(depth)
    assert len(dw_weights) == depth
    P = ps ** depth
    assert H % P == 0 and W % P == 0, "img size must be divisible by patch_size**depth"
    Hg, Wg = H // P, W // P
    E = pw_weight.shape[0]
    M = B * Hg * Wg
    K = C * P * P
    if out_dtype is None:
        out_dtype = x.dtype

    # ---- parameter folding (tiny one-time work, fused by XLA) ----------------
    # kernel_size == stride => the `depth` depthwise convs compose exactly into
    # one per-channel (P x P) weight (tensor product of the per-stage kernels).
    comp = jnp.ones((C, 1, 1), jnp.float32)
    for w in dw_weights:                       # application order
        wsq = w[:, 0].astype(jnp.float32)      # [C, ps, ps]
        Pc = comp.shape[1]
        comp = jnp.einsum('cab,cde->cadbe', wsq, comp).reshape(C, ps * Pc, ps * Pc)
    dw_comp = comp.reshape(C, P * P)           # [C, P*P]

    # Fold the depthwise stage into the pointwise projection: W_fused[K, E].
    pw_t = pw_weight.reshape(E, C).T.astype(jnp.float32)              # [C, E]
    w_fused = (dw_comp[:, :, None] * pw_t[:, None, :]).reshape(K, E)  # [C*P*P, E]
    w_fused = w_fused.astype(compute_dtype)
    bias = pw_bias.astype(jnp.float32).reshape(1, E)                  # f32 epilogue

    # ---- tiling: generation-aware VMEM budget ---------------------------------
    in_bytes = jnp.dtype(compute_dtype).itemsize
    out_bytes = jnp.dtype(out_dtype).itemsize
    vmem_cap = _vmem_capacity_bytes()
    resident = K * E * in_bytes + E * 4               # single-buffered weight + bias
    tile_budget = max((vmem_cap * 3) // 8 - resident, 2 * 1024 * 1024)

    if tm is None:
        tm, m_pad = _select_tm(M, K, E, in_bytes, out_bytes, tile_budget)
    else:
        tm = max(1, min(int(tm), M))
        if tm != M and tm % 8 != 0:
            tm = max(8, (tm // 8) * 8)
        m_pad = _round_up(M, tm)

    # ---- patch extraction ------------------------------------------------------
    # TODO(synk): do this rearrangement on-chip (grid over (B, Hg) reading native
    # NCHW) to remove this single transpose+cast HBM pass; the (8,128) block-shape
    # constraint on the P-sized sublane dim makes that non-trivial, so it stays a
    # single XLA copy-fusion here (read x once, write bf16 patches once).
    patches = (x.reshape(B, C, Hg, P, Wg, P)
                 .transpose(0, 2, 4, 1, 3, 5)
                 .reshape(M, K)
                 .astype(compute_dtype))
    if m_pad != M:
        patches = jnp.pad(patches, ((0, m_pad - M), (0, 0)))

    # VMEM actually used: double-buffered in/out tiles + resident weight/bias,
    # plus headroom; never request the whole physical VMEM (v7x has 64 MiB).
    needed = 2 * tm * (K * in_bytes + E * out_bytes) + resident
    vmem_limit = int(min(max(needed + needed // 2, 32 * 1024 * 1024),
                         vmem_cap - 16 * 1024 * 1024))

    out = pl.pallas_call(
        _patch_embed_dw_kernel,
        out_shape=jax.ShapeDtypeStruct((m_pad, E), out_dtype),
        grid_spec=pltpu.PrefetchScalarGridSpec(
            num_scalar_prefetch=0,
            grid=(m_pad // tm,),
            in_specs=[
                # streamed patch tiles (last dim == full K: no HBM zero padding)
                pl.BlockSpec((tm, K), lambda i: (i, 0)),
                # resident fused weight / bias: constant index_map, single buffer
                pl.BlockSpec((K, E), lambda i: (0, 0), pipeline_mode=pl.Buffered(1)),
                pl.BlockSpec((1, E), lambda i: (0, 0), pipeline_mode=pl.Buffered(1)),
            ],
            # last dim == full E: no output lane padding, no post-kernel slice
            out_specs=pl.BlockSpec((tm, E), lambda i: (i, 0)),
        ),
        compiler_params=pltpu.CompilerParams(
            dimension_semantics=("parallel",),   # M axis shards across v7x's 2 TCs
            vmem_limit_bytes=vmem_limit,
        ),
    )(patches, w_fused, bias)

    if m_pad != M:
        # Padded rows hold `bias` (zeros @ W + bias), not zeros; drop them.
        out = out[:M]
    return out.reshape(B, Hg * Wg, E)


def reference(x, dw_weights, pw_weight, pw_bias, ps):
    """Pure-JAX reference reproducing the PyTorch forward exactly."""
    C = x.shape[1]
    y = x
    for w in dw_weights:
        y = jax.lax.conv_general_dilated(
            y, w, window_strides=(ps, ps), padding='VALID',
            dimension_numbers=('NCHW', 'OIHW', 'NCHW'),
            feature_group_count=C)
    y = jax.lax.conv_general_dilated(
        y, pw_weight, window_strides=(1, 1), padding='VALID',
        dimension_numbers=('NCHW', 'OIHW', 'NCHW'))
    y = y + pw_bias.reshape(1, -1, 1, 1)
    B, E, Hg, Wg = y.shape
    return y.reshape(B, E, Hg * Wg).transpose(0, 2, 1)


if __name__ == "__main__":
    # Small shapes consistent with the module: img_size=16, patch_size=2,
    # depth=2, in_chans=4, embed_dim=32 -> grid (4,4), num_patches=16.
    B, C, IMG, PS, DEPTH, E = 2, 4, 16, 2, 2, 32

    key = jax.random.PRNGKey(0)
    kx, k0, k1, kpw, kb = jax.random.split(key, 5)

    x = jax.random.normal(kx, (B, C, IMG, IMG), jnp.float32)
    # depthwise convs: Conv2d(C, C, ks=PS, stride=PS, groups=C, bias=False) -> [C, 1, PS, PS]
    dw_weights = [
        jax.random.normal(k0, (C, 1, PS, PS), jnp.float32) * 0.5,
        jax.random.normal(k1, (C, 1, PS, PS), jnp.float32) * 0.5,
    ]
    # pointwise conv: Conv2d(C, E, ks=1) -> weight [E, C, 1, 1], bias [E]
    pw_weight = jax.random.normal(kpw, (E, C, 1, 1), jnp.float32) * 0.5
    pw_bias = jax.random.normal(kb, (E,), jnp.float32) * 0.1

    ref = jax.block_until_ready(reference(x, dw_weights, pw_weight, pw_bias, PS))
    num_patches = (IMG // PS ** DEPTH) ** 2

    # Default path: bf16 streaming (HBM-bound op), f32 accumulation, f32 output.
    fwd_bf16 = jax.jit(lambda a, dw, pw, pb: patch_embed_dw(a, dw, pw, pb, PS, DEPTH))
    out_bf16 = jax.block_until_ready(fwd_bf16(x, dw_weights, pw_weight, pw_bias))
    assert out_bf16.shape == (B, num_patches, E), out_bf16.shape
    np.testing.assert_allclose(np.asarray(out_bf16), np.asarray(ref), rtol=5e-2, atol=5e-2)

    # f32 path with an explicit small row tile (exercises the multi-step pipelined grid).
    fwd_f32 = jax.jit(lambda a, dw, pw, pb: patch_embed_dw(
        a, dw, pw, pb, PS, DEPTH, tm=8, compute_dtype=jnp.float32))
    out_f32 = jax.block_until_ready(fwd_f32(x, dw_weights, pw_weight, pw_bias))
    assert out_f32.shape == (B, num_patches, E), out_f32.shape
    np.testing.assert_allclose(np.asarray(out_f32), np.asarray(ref), rtol=1e-4, atol=1e-4)

    print("KERNEL_OK")
</pallas_src>

<mosaic_0001>
module attributes {stable_mosaic.version = 11 : i64} {
  func.func @_patch_embed_dw_kernel(%arg0: i32, %arg1: memref<32x64xbf16, #tpu.memory_space<vmem>>, %arg2: memref<64x32xbf16, #tpu.memory_space<vmem>>, %arg3: memref<1x32xf32, #tpu.memory_space<vmem>>, %arg4: memref<32x32xf32, #tpu.memory_space<vmem>>) attributes {dimension_semantics = [#tpu.dimension_semantics<parallel>], iteration_bounds = array<i64: 1>, scalar_prefetch = 0 : i64, scratch_operands = 0 : i64, tpu.core_type = #tpu.core_type<tc>, window_params = [{transform_indices = @transform_0, window_bounds = array<i64: 32, 64>}, {pipeline_mode = #tpu.pipeline_mode<synchronous>, transform_indices = @transform_1, window_bounds = array<i64: 64, 32>}, {pipeline_mode = #tpu.pipeline_mode<synchronous>, transform_indices = @transform_2, window_bounds = array<i64: 1, 32>}, {transform_indices = @transform_3, window_bounds = array<i64: 32, 32>}]} {
    %c0 = arith.constant 0 : index
    %c0_0 = arith.constant 0 : index
    %0 = vector.load %arg1[%c0, %c0_0] : memref<32x64xbf16, #tpu.memory_space<vmem>>, vector<32x64xbf16>
    %c0_1 = arith.constant 0 : index
    %c0_2 = arith.constant 0 : index
    %1 = vector.load %arg2[%c0_1, %c0_2] : memref<64x32xbf16, #tpu.memory_space<vmem>>, vector<64x32xbf16>
    %cst = arith.constant dense<0.000000e+00> : vector<32x32xf32>
    %2 = tpu.matmul %0, %1, %cst {dimension_numbers = #tpu.dot_dimension_numbers<[1], [0], [0], [1], [0, 0, 1, 1], [], []>} : vector<32x64xbf16>, vector<64x32xbf16>, vector<32x32xf32> -> vector<32x32xf32>
    %c0_3 = arith.constant 0 : index
    %c0_4 = arith.constant 0 : index
    %3 = vector.load %arg3[%c0_3, %c0_4] : memref<1x32xf32, #tpu.memory_space<vmem>>, vector<1x32xf32>
    %4 = vector.broadcast %3 : vector<1x32xf32> to vector<32x32xf32>
    %5 = arith.addf %2, %4 : vector<32x32xf32>
    %c0_5 = arith.constant 0 : index
    %c0_6 = arith.constant 0 : index
    %6 = vector.load %arg4[%c0_5, %c0_6] : memref<32x32xf32, #tpu.memory_space<vmem>>, vector<32x32xf32>
    tpu.vector_store %arg4[%c0_5, %c0_6], %5 {strides = array<i32>} : memref<32x32xf32, #tpu.memory_space<vmem>>, vector<32x32xf32>,
    return
  }
  func.func @transform_0(%arg0: i32) -> (i32, i32) {
    %c0_i32 = arith.constant 0 : i32
    %c0_i32_0 = arith.constant 0 : i32
    return %arg0, %c0_i32 : i32, i32
  }
  func.func @transform_1(%arg0: i32) -> (i32, i32) {
    %c0_i32 = arith.constant 0 : i32
    %c0_i32_0 = arith.constant 0 : i32
    %c0_i32_1 = arith.constant 0 : i32
    return %c0_i32, %c0_i32_0 : i32, i32
  }
  func.func @transform_2(%arg0: i32) -> (i32, i32) {
    %c0_i32 = arith.constant 0 : i32
    %c0_i32_0 = arith.constant 0 : i32
    %c0_i32_1 = arith.constant 0 : i32
    return %c0_i32, %c0_i32_0 : i32, i32
  }
  func.func @transform_3(%arg0: i32) -> (i32, i32) {
    %c0_i32 = arith.constant 0 : i32
    %c0_i32_0 = arith.constant 0 : i32
    return %arg0, %c0_i32 : i32, i32
  }
}

</mosaic_0001>

<llo_original>
// kernel: _lambda_.1
$region0: #{_lambda_.1}
  #allocation0 [shape = 'u32[]', space=smem, size = 0x4, offset = 0x4, fixed_abs, tag = 'smem constant byte address 0x4 - core index']
  #allocation1 [shape = 'u32[144,128]{1,0:T(1,128)}', space=vmem, size = 0x12000, scoped, tag = 'internal scratch']
  %s0 = inlined_call_operand.vmem [shape: bf16[32,64], index: 0, kind: input, shape index: {}]
  %s1 = inlined_call_operand.vmem [shape: bf16[64,32], index: 1, kind: input, shape index: {}]
  %s2 = inlined_call_operand.vmem [shape: f32[1,32], index: 2, kind: input, shape index: {}]
  %s3 = inlined_call_operand.hbm [shape: f32[32,32], index: 3, kind: output, shape index: {}]
  %s4 = sld [smem:[#allocation0]]
  $region22: #{_lambda_.1} parent=0
    _
  %s6 = ssub.s32 1, %s4
  %s7 = scalar_select 0, %s6, %s4
  $region1: #{_lambda_.1} parent=0
    #allocation2 [shape = 'u8[16384]{0}', space=vmem, size = 0x4000, scoped, tag = 'output window, operand 0, single buffered']
    #allocation3 [shape = 's32[1]{0}', space=sflag, size = 0x4, scoped, tag = 'scoped memory for _lambda_.1']
    %8 = vsyncpa [#allocation3], 0
    // Predicated region
    $region2: #{_lambda_.1} parent=1 // pred_check
      _
    $region3: #{_lambda_.1} parent=1 // pred_check_branch
      %10 = sbr.rel (0) target = $region5
    $region4: #{_lambda_.1} parent=1 // pred_region
      _
    $region5: #{_lambda_.1} parent=1 // pred_fallthru
      _
    // Predicated region
    $region6: #{_lambda_.1} parent=1 // pred_check
      _
    $region7: #{_lambda_.1} parent=1 // pred_check_branch
      %12 = sbr.rel (0) target = $region9
    $region8: #{_lambda_.1} parent=1 // pred_region
      _
    $region9: #{_lambda_.1} parent=1 // pred_fallthru
      _
    // Predicated region
    $region10: #{_lambda_.1} parent=1 // pred_check
      _
    $region11: #{_lambda_.1} parent=1 // pred_check_branch
      %14 = sbr.rel (0) target = $region13
    $region12: #{_lambda_.1} parent=1 // pred_region
      _
    $region13: #{_lambda_.1} parent=1 // pred_fallthru
      _
    %v16 = vld [vmem:[%s0] sm:$0xf]
    %v17 = vld [vmem:[%s0 + $0x4] sm:$0xf]
    %v18 = vld [vmem:[%s0 + $0x8] sm:$0xf]
    %v19 = vld [vmem:[%s0 + $0xc] sm:$0xf]
    %v20 = vld [vmem:[%s1] sm:$0xf]
    %v21 = vld [vmem:[%s1 + $0x4] sm:$0xf]
    %v22 = vld [vmem:[%s1 + $0x8] sm:$0xf]
    %v23 = vld [vmem:[%s1 + $0xc] sm:$0xf]
    %v24 = vld [vmem:[%s1 + $0x10] sm:$0xf]
    %v25 = vld [vmem:[%s1 + $0x14] sm:$0xf]
    %v26 = vld [vmem:[%s1 + $0x18] sm:$0xf]
    %v27 = vld [vmem:[%s1 + $0x1c] sm:$0xf]
    %v28 = vld [vmem:[%s2] sm:$0x1]
    %v30 = vlaneseq
    %v31 = vshrl.u32 %v30, 7
    %v32 = vsub.s32 0, %v31
    %v33 = vrot.slane %v28, %v32
    %v39 = vunpack.c.l.b16 %v16
    %v40 = vunpack.c.l.b16 %v17
    %v41 = vunpack.c.l.b16 %v18
    %v42 = vunpack.c.l.b16 %v19
    %v43 = vpack.c.b16 %v40, %v39
    %v44 = vpack.c.b16 %v42, %v41
    %v53 = vunpack.c.l.b16 %v20
    %v54 = vunpack.c.l.b16 %v21
    %v55 = vunpack.c.l.b16 %v22
    %v56 = vunpack.c.l.b16 %v23
    %v57 = vunpack.c.l.b16 %v24
    %v58 = vunpack.c.l.b16 %v25
    %v59 = vunpack.c.l.b16 %v26
    %v60 = vunpack.c.l.b16 %v27
    %v61 = vpack.c.b16 %v54, %v53
    %v62 = vpack.c.b16 %v56, %v55
    %v63 = vpack.c.b16 %v58, %v57
    %v64 = vpack.c.b16 %v60, %v59
    %vm69 = vcmask 523264
    %v71 = vsel %vm69, %v43, 0
    %v74 = vsel %vm69, %v44, 0
    %76 = vmatprep.subr.bf16.mxu0 0
    %77 = vmatpush1.bf16.msra.mxu0 %v61
    %78 = vmatprep.subr.bf16.mxu0 0
    %79 = vmatpush1.bf16.msra.mxu0 %v62
    %80 = vmatprep.subr.bf16.mxu0 0
    %81 = vmatpush1.bf16.msra.mxu0 %v63
    %82 = vmatprep.subr.bf16.mxu0 0
    %83 = vmatpush1.bf16.msra.mxu0 %v64
    %84 = vmatprep.subr.bf16.mxu0 0
    %85 = vmatpush1.bf16.msra.mxu0 0
    %86 = vmatprep.subr.bf16.mxu0 0
    %87 = vmatpush1.bf16.msra.mxu0 0
    %88 = vmatprep.subr.bf16.mxu0 0
    %89 = vmatpush1.bf16.msra.mxu0 0
    %90 = vmatprep.subr.bf16.mxu0 0
    %91 = vmatpush1.bf16.msra.mxu0 0
    %92 = vmatprep.subr.bf16.mxu0 0
    %93 = vmatpush1.bf16.msra.mxu0 0
    %94 = vmatprep.subr.bf16.mxu0 0
    %95 = vmatpush1.bf16.msra.mxu0 0
    %96 = vmatprep.subr.bf16.mxu0 0
    %97 = vmatpush1.bf16.msra.mxu0 0
    %98 = vmatprep.subr.bf16.mxu0 0
    %99 = vmatpush1.bf16.msra.mxu0 0
    %100 = vmatprep.subr.bf16.mxu0 0
    %101 = vmatpush1.bf16.msra.mxu0 0
    %102 = vmatprep.subr.bf16.mxu0 0
    %103 = vmatpush1.bf16.msra.mxu0 0
    %104 = vmatprep.subr.bf16.mxu0 0
    %105 = vmatpush1.bf16.msra.mxu0 0
    %106 = vmatprep.subr.bf16.mxu0 0
    %107 = vmatpush1.bf16.msra.mxu0 0
    %108 = vmatprep.mubr.bf16.mxu0 0
    %109 = vmatmul.mubr.bf16.gmra.mrb[0].mxu0 %v71
    %v110 = vpop.f32.mrb[0].mxu0
    %v111 = vadd.f32 %v33, %v110
    %v112 = vpop.f32.mrb[0].mxu0
    %v113 = vpop.f32.mrb[0].mxu0
    %v114 = vadd.f32 %v33, %v113
    %v115 = vpop.f32.mrb[0].mxu0
    %116 = vmatprep.mubr.bf16.mxu0 0
    %117 = vmatmul.mubr.bf16.gmra.mrb[0].mxu0 %v74
    %v118 = vpop.f32.mrb[0].mxu0
    %v119 = vadd.f32 %v33, %v118
    %v120 = vpop.f32.mrb[0].mxu0
    %v121 = vpop.f32.mrb[0].mxu0
    %v122 = vadd.f32 %v33, %v121
    %v123 = vpop.f32.mrb[0].mxu0
    %124 = vdwg.mxu0
    %vm125 = vcmask 261120
    %126 = vst.msk [vmem:[#allocation2] sm:$0xff] %vm125, %v111
    %127 = vst.msk [vmem:[#allocation2 + $0x8] sm:$0xff] %vm125, %v114
    %128 = vst.msk [vmem:[#allocation2 + $0x10] sm:$0xff] %vm125, %v119
    %129 = vst.msk [vmem:[#allocation2 + $0x18] sm:$0xff] %vm125, %v122
    // Predicated region
    $region14: #{_lambda_.1} parent=1 // pred_check
      _
    $region15: #{_lambda_.1} parent=1 // pred_check_branch
      %131 = sbr.rel (0) target = $region17
    $region16: #{_lambda_.1} parent=1 // pred_region
      %s133 = ssub.s32 512, 512
      %134 = vsyncadd [#allocation3], %s133
      %s135 = sshll.u32 [#allocation2], 4
      %s136 = int_to_ptr.vmem [resolvable:$true] %s135
      %141 = dma.vmem_to_hbm [thread:$0]  %s136, 512, %s3, [#allocation3], 128, 128, 8
    $region17: #{_lambda_.1} parent=1 // pred_fallthru
      _
    // Predicated region
    $region18: #{_lambda_.1} parent=1 // pred_check
      _
    $region19: #{_lambda_.1} parent=1 // pred_check_branch
      %143 = sbr.rel (0) target = $region21
    $region20: #{_lambda_.1} parent=1 // pred_region
      %144 = dma.done [#allocation3], 512
    $region21: #{_lambda_.1} parent=1 // pred_fallthru
      _
    %145 = vsyncpa [#allocation3], 1

</llo_original>
